<compile_context>
chip_gen: v6e
topology: v6e:2x2x1
jax: 0.10.0
libtpu: 0.0.40
codegen_flags: <defaults>
</compile_context>

<pallas_src>
import functools

import jax
import jax.numpy as jnp
from jax.experimental import pallas as pl
from jax.experimental.pallas import tpu as pltpu

ALPHA = 1.0   # module default alpha=1
GAMMA = 2     # module default gamma=2 (integer exponent -> integer_pow)


def _ce_partial_kernel(x_ref, t_ref, o_ref, *, n_total, tile_n):
    """Per-tile partial sum of cross-entropy.

    x_ref: (tile_n, C) logits tile (any float dtype) in VMEM
    t_ref: (tile_n, 1) int32 targets tile in VMEM
    o_ref: (1, 1) f32 partial CE sum for this tile
    """
    i = pl.program_id(0)

    x = x_ref[...].astype(jnp.float32)          # cast on-chip, not on the wire
    t = t_ref[...]                              # (tile_n, 1) int32
    tn, c = x.shape

    # Numerically stable log-sum-exp per row.
    m = jnp.max(x, axis=-1, keepdims=True)                                # (tn, 1)
    lse = jnp.log(jnp.sum(jnp.exp(x - m), axis=-1, keepdims=True)) + m    # (tn, 1)

    # Gather the target logit via a one-hot mask (no dynamic gather on TPU).
    cols = jax.lax.broadcasted_iota(jnp.int32, (tn, c), 1)                # (tn, c)
    picked = jnp.sum(jnp.where(cols == t, x, 0.0), axis=-1, keepdims=True)

    ce = lse - picked                                                     # (tn, 1)

    # Mask rows belonging to padding of the last (partial) tile.
    rows = jax.lax.broadcasted_iota(jnp.int32, (tn, 1), 0) + i * tile_n
    ce = jnp.where(rows < n_total, ce, 0.0)

    # One f32 partial sum per tile (lane-narrow store, but it's 4 bytes/tile —
    # negligible next to the tile_n*C logits DMA).
    o_ref[...] = jnp.sum(ce, axis=0, keepdims=True)                       # (1, 1)


def _choose_tile_n(n, c, itemsize):
    """Pick a batch tile that fits the smallest default scoped VMEM (v5e 16MiB)
    with double buffering, budgeting C rounded up to the 128-lane width."""
    c_pad = ((c + 127) // 128) * 128
    budget = 8 * 1024 * 1024                     # ~half of v5e's 16 MiB default
    tile = budget // (2 * c_pad * max(int(itemsize), 1))   # x2: double buffer
    tile = max(32, (tile // 32) * 32)            # sublane-aligned for f32/bf16
    tile = min(tile, 2048)                       # diminishing returns past ~1K rows
    return n if tile >= n else tile


def focal_loss(logits, targets, *, alpha=ALPHA, gamma=GAMMA, tile_n=None):
    """logits: (N, C) float (any float dtype), targets: (N,) int class ids."""
    n, c = logits.shape
    t = targets.astype(jnp.int32).reshape(n, 1)

    if tile_n is None:
        tile_n = _choose_tile_n(n, c, jnp.dtype(logits.dtype).itemsize)
    else:
        tile_n = min(int(tile_n), n)
        if tile_n < n:
            tile_n = max(32, (tile_n // 32) * 32)   # keep sublane alignment

    num_tiles = pl.cdiv(n, tile_n)

    partials = pl.pallas_call(
        functools.partial(_ce_partial_kernel, n_total=n, tile_n=tile_n),
        grid=(num_tiles,),
        in_specs=[
            pl.BlockSpec((tile_n, c), lambda i: (i, 0)),   # logits tile
            pl.BlockSpec((tile_n, 1), lambda i: (i, 0)),   # targets tile
        ],
        out_specs=pl.BlockSpec((1, 1), lambda i: (i, 0)),  # one partial per tile
        out_shape=jax.ShapeDtypeStruct((num_tiles, 1), jnp.float32),
        compiler_params=pltpu.CompilerParams(
            dimension_semantics=("parallel",),             # both TCs on v7x
            vmem_limit_bytes=32 * 1024 * 1024,
        ),
    )(logits, t)

    # Tiny epilogue in plain JAX (reduction='mean' + focal transform on the
    # reduced CE, exactly as the PyTorch module does).
    ce_mean = jnp.sum(partials) / jnp.float32(n)
    pt = jnp.exp(-ce_mean)
    return (alpha * (1.0 - pt) ** gamma * ce_mean).astype(jnp.float32)


def focal_loss_ref(logits, targets, *, alpha=ALPHA, gamma=GAMMA):
    # pure-JAX reference mirroring F.cross_entropy(reduction='mean') + focal
    logits = logits.astype(jnp.float32)
    logp = jax.nn.log_softmax(logits, axis=-1)
    nll = -jnp.take_along_axis(logp, targets[:, None].astype(jnp.int32), axis=-1)[:, 0]
    ce = jnp.mean(nll)
    pt = jnp.exp(-ce)
    return alpha * (1.0 - pt) ** gamma * ce


if __name__ == "__main__":
    key = jax.random.PRNGKey(0)
    k1, k2, k3, k4 = jax.random.split(key, 4)

    # Small shape consistent with the module: (batch, num_classes) logits.
    N, C = 8, 32
    logits = jax.random.normal(k1, (N, C), dtype=jnp.float32)
    targets = jax.random.randint(k2, (N,), 0, C, dtype=jnp.int32)
    out = jax.block_until_ready(focal_loss(logits, targets))
    ref = focal_loss_ref(logits, targets)
    assert jnp.allclose(out, ref, rtol=1e-5, atol=1e-5), (out, ref)

    # Multi-tile path: bf16 on the wire, grid > 1, masked partial last tile.
    N2, C2 = 300, 32
    logits2 = jax.random.normal(k3, (N2, C2), dtype=jnp.float32).astype(jnp.bfloat16)
    targets2 = jax.random.randint(k4, (N2,), 0, C2, dtype=jnp.int32)
    out2 = jax.block_until_ready(focal_loss(logits2, targets2, tile_n=128))
    ref2 = focal_loss_ref(logits2, targets2)
    assert jnp.allclose(out2, ref2, rtol=1e-4, atol=1e-4), (out2, ref2)

    print("KERNEL_OK")
</pallas_src>

<mosaic_0001>
module attributes {stable_mosaic.version = 11 : i64} {
  func.func @_ce_partial_kernel(%arg0: i32, %arg1: memref<8x32xf32, #tpu.memory_space<vmem>>, %arg2: memref<8x1xi32, #tpu.memory_space<vmem>>, %arg3: memref<1x1xf32, #tpu.memory_space<vmem>>) attributes {dimension_semantics = [#tpu.dimension_semantics<parallel>], iteration_bounds = array<i64: 1>, scalar_prefetch = 0 : i64, scratch_operands = 0 : i64, tpu.core_type = #tpu.core_type<tc>, window_params = [{transform_indices = @transform_0, window_bounds = array<i64: 8, 32>}, {transform_indices = @transform_1, window_bounds = array<i64: 8, 1>}, {transform_indices = @transform_2, window_bounds = array<i64: 1, 1>}]} {
    %c0 = arith.constant 0 : index
    %c0_0 = arith.constant 0 : index
    %0 = vector.load %arg1[%c0, %c0_0] : memref<8x32xf32, #tpu.memory_space<vmem>>, vector<8x32xf32>
    %c0_1 = arith.constant 0 : index
    %c0_2 = arith.constant 0 : index
    %1 = vector.load %arg2[%c0_1, %c0_2] : memref<8x1xi32, #tpu.memory_space<vmem>>, vector<8x1xi32>
    %cst = arith.constant dense<0xFF800000> : vector<8xf32>
    %2 = vector.multi_reduction <maximumf>, %0, %cst [1] : vector<8x32xf32> to vector<8xf32>
    %3 = vector.shape_cast %2 : vector<8xf32> to vector<8x1xf32>
    %4 = vector.broadcast %3 : vector<8x1xf32> to vector<8x32xf32>
    %5 = arith.subf %0, %4 : vector<8x32xf32>
    %6 = math.exp %5 : vector<8x32xf32>
    %cst_3 = arith.constant dense<0.000000e+00> : vector<8xf32>
    %7 = vector.multi_reduction <add>, %6, %cst_3 [1] : vector<8x32xf32> to vector<8xf32>
    %8 = vector.shape_cast %7 : vector<8xf32> to vector<8x1xf32>
    %9 = math.log %8 : vector<8x1xf32>
    %10 = arith.addf %9, %3 : vector<8x1xf32>
    %11 = tpu.iota {dimensions = array<i32: 1>} : vector<8x32xi32>
    %12 = vector.broadcast %1 : vector<8x1xi32> to vector<8x32xi32>
    %13 = arith.cmpi eq, %11, %12 : vector<8x32xi32>
    %cst_4 = arith.constant 0.000000e+00 : f32
    %14 = vector.broadcast %cst_4 : f32 to vector<8x32xf32>
    %15 = arith.select %13, %0, %14 : vector<8x32xi1>, vector<8x32xf32>
    %cst_5 = arith.constant dense<0.000000e+00> : vector<8xf32>
    %16 = vector.multi_reduction <add>, %15, %cst_5 [1] : vector<8x32xf32> to vector<8xf32>
    %17 = vector.shape_cast %16 : vector<8xf32> to vector<8x1xf32>
    %18 = arith.subf %10, %17 : vector<8x1xf32>
    %19 = tpu.iota {dimensions = array<i32: 0>} : vector<8x1xi32>
    %c8_i32 = arith.constant 8 : i32
    %20 = arith.muli %arg0, %c8_i32 : i32
    %21 = vector.broadcast %20 : i32 to vector<8x1xi32>
    %22 = arith.addi %19, %21 : vector<8x1xi32>
    %c8_i32_6 = arith.constant 8 : i32
    %23 = vector.broadcast %c8_i32_6 : i32 to vector<8x1xi32>
    %24 = arith.cmpi slt, %22, %23 : vector<8x1xi32>
    %cst_7 = arith.constant 0.000000e+00 : f32
    %25 = vector.broadcast %cst_7 : f32 to vector<8x1xf32>
    %26 = arith.select %24, %18, %25 : vector<8x1xi1>, vector<8x1xf32>
    %cst_8 = arith.constant dense<0.000000e+00> : vector<1xf32>
    %27 = vector.multi_reduction <add>, %26, %cst_8 [0] : vector<8x1xf32> to vector<1xf32>
    %28 = vector.shape_cast %27 : vector<1xf32> to vector<1x1xf32>
    %c0_9 = arith.constant 0 : index
    %c0_10 = arith.constant 0 : index
    %29 = vector.load %arg3[%c0_9, %c0_10] : memref<1x1xf32, #tpu.memory_space<vmem>>, vector<1x1xf32>
    tpu.vector_store %arg3[%c0_9, %c0_10], %28 {strides = array<i32>} : memref<1x1xf32, #tpu.memory_space<vmem>>, vector<1x1xf32>,
    return
  }
  func.func @transform_0(%arg0: i32) -> (i32, i32) {
    %c0_i32 = arith.constant 0 : i32
    %c0_i32_0 = arith.constant 0 : i32
    return %arg0, %c0_i32 : i32, i32
  }
  func.func @transform_1(%arg0: i32) -> (i32, i32) {
    %c0_i32 = arith.constant 0 : i32
    %c0_i32_0 = arith.constant 0 : i32
    return %arg0, %c0_i32 : i32, i32
  }
  func.func @transform_2(%arg0: i32) -> (i32, i32) {
    %c0_i32 = arith.constant 0 : i32
    %c0_i32_0 = arith.constant 0 : i32
    return %arg0, %c0_i32 : i32, i32
  }
}

</mosaic_0001>

<llo_original>
// kernel: tpu_custom_call.1
$region0: #{tpu_custom_call.1}
  #allocation0 [shape = 'u32[]', space=smem, size = 0x4, offset = 0x4, fixed_abs, tag = 'smem constant byte address 0x4 - core index']
  #allocation1 [shape = 'u32[144,128]{1,0:T(1,128)}', space=vmem, size = 0x12000, scoped, tag = 'internal scratch']
  %s0 = inlined_call_operand.vmem [shape: f32[8,32], index: 0, kind: input, shape index: {}]
  %s1 = inlined_call_operand.vmem [shape: s32[8,1], index: 1, kind: input, shape index: {}]
  %s2 = inlined_call_operand.hbm [shape: f32[1,1], index: 2, kind: output, shape index: {}]
  %s3 = sld [smem:[#allocation0]]
  $region18: #{tpu_custom_call.1} parent=0
    _
  %s5 = ssub.s32 1, %s3
  %s6 = scalar_select 0, %s5, %s3
  $region1: #{tpu_custom_call.1} parent=0
    #allocation2 [shape = 'u8[512]{0}', space=vmem, size = 0x400, scoped, tag = 'output window, operand 0, single buffered']
    #allocation3 [shape = 's32[1]{0}', space=sflag, size = 0x4, scoped, tag = 'scoped memory for tpu_custom_call.1']
    %7 = vsyncpa [#allocation3], 0
    // Predicated region
    $region2: #{tpu_custom_call.1} parent=1 // pred_check
      _
    $region3: #{tpu_custom_call.1} parent=1 // pred_check_branch
      %9 = sbr.rel (0) target = $region5
    $region4: #{tpu_custom_call.1} parent=1 // pred_region
      _
    $region5: #{tpu_custom_call.1} parent=1 // pred_fallthru
      _
    // Predicated region
    $region6: #{tpu_custom_call.1} parent=1 // pred_check
      _
    $region7: #{tpu_custom_call.1} parent=1 // pred_check_branch
      %11 = sbr.rel (0) target = $region9
    $region8: #{tpu_custom_call.1} parent=1 // pred_region
      _
    $region9: #{tpu_custom_call.1} parent=1 // pred_fallthru
      _
    %v12 = vld [vmem:[%s0] sm:$0xff]
    %v13 = vld [vmem:[%s1] sm:$0xff]
    %vm14 = vcmask 261120
    %v15 = vsel %vm14, %v12, -inf
    %16 = vmax.xlane.f32.xlu0 %v15
    %v17 = vpop.xlane.xlu0 %16
    %v18 = vsub.f32 %v12, %v17
    %v19 = vmul.f32 %v18, 1.442695
    %v20 = vpow.pop %v19
    %v21 = vsel %vm14, %v20, 0.0
    %22 = vadd.xlane.f32.xlu0 %v21
    %v23 = vpop.xlane.xlu0 %22
    %v24 = vlog2.pop %v23
    %v25 = vmul.f32 %v24, 0.6931472
    %v26 = vadd.f32 %v25, %v17
    %v27 = vlaneseq
    %v28 = vand.u32 %v27, 127
    %29 = vset.pattern.permute.xlu0 0
    %30 = vperm.xlu0 %29, %v13
    %v31 = vpop.permute.xlu0 %30
    %vm32 = vcmp.eq.s32.totalorder %v28, %v31
    %v33 = vsel %vm32, %v12, 0.0
    %v34 = vsel %vm14, %v33, 0.0
    %35 = vadd.xlane.f32.xlu0 %v34
    %v36 = vpop.xlane.xlu0 %35
    %v37 = vsub.f32 %v26, %v36
    %v38 = vlaneseq
    %v39 = vshrl.u32 %v38, 7
    %s40 = smul.u32 0, 8
    %v41 = vstv %s40
    %v42 = vadd.s32 %v39, %v41
    %vm43 = vcmp.lt.s32.totalorder %v42, 8
    %v44 = vsel %vm43, %v37, 0.0
    %v45 = vrot.slane %v44, 4
    %v46 = vadd.f32 %v44, %v45
    %v47 = vrot.slane %v46, 2
    %v48 = vadd.f32 %v46, %v47
    %v49 = vrot.slane %v48, 1
    %v50 = vadd.f32 %v48, %v49
    %vm51 = vcmask 0
    %52 = vst.msk [vmem:[#allocation2] sm:$0x1] %vm51, %v50
    // Predicated region
    $region10: #{tpu_custom_call.1} parent=1 // pred_check
      _
    $region11: #{tpu_custom_call.1} parent=1 // pred_check_branch
      %54 = sbr.rel (0) target = $region13
    $region12: #{tpu_custom_call.1} parent=1 // pred_region
      %s56 = ssub.s32 16, 16
      %57 = vsyncadd [#allocation3], %s56
      %s59 = sshll.u32 [#allocation2], 4
      %s60 = int_to_ptr.vmem [resolvable:$true] %s59
      %62 = dma.vmem_to_hbm [thread:$0]  %s60, 16, %s2, [#allocation3]
    $region13: #{tpu_custom_call.1} parent=1 // pred_fallthru
      _
    // Predicated region
    $region14: #{tpu_custom_call.1} parent=1 // pred_check
      _
    $region15: #{tpu_custom_call.1} parent=1 // pred_check_branch
      %64 = sbr.rel (0) target = $region17
    $region16: #{tpu_custom_call.1} parent=1 // pred_region
      %65 = dma.done [#allocation3], 16
    $region17: #{tpu_custom_call.1} parent=1 // pred_fallthru
      _
    %66 = vsyncpa [#allocation3], 1

</llo_original>
